<compile_context>
chip_gen: v6e
topology: v6e:2x2x1
jax: 0.10.0
libtpu: 0.0.40
codegen_flags: <defaults>
</compile_context>

<pallas_src>
import math
import numpy as np

import jax
import jax.numpy as jnp
from jax.experimental import pallas as pl
from jax.experimental.pallas import tpu as pltpu

_E8P_CODESZ = 8

_CompilerParamsCls = getattr(pltpu, "CompilerParams", None) or getattr(pltpu, "TPUCompilerParams", None)


# ----------------------------------------------------------------------------------
# Codebook construction (deterministic, mirrors get_norm12 / get_packed_abs_grid)
# ----------------------------------------------------------------------------------
def _get_norm12():
    return np.array(
        [[3, 1, 1, 1, 3, 3, 3, 3], [1, 3, 1, 1, 3, 3, 3, 3], [1, 1, 3, 1, 3, 3, 3, 3],
         [1, 1, 1, 3, 3, 3, 3, 3], [3, 3, 3, 1, 3, 3, 1, 1], [3, 3, 3, 1, 3, 1, 3, 1],
         [3, 3, 3, 1, 1, 3, 3, 1], [3, 3, 3, 1, 3, 1, 1, 3], [3, 3, 3, 1, 1, 3, 1, 3],
         [3, 3, 3, 1, 1, 1, 3, 3], [3, 3, 1, 3, 3, 3, 1, 1], [3, 3, 1, 3, 3, 1, 3, 1],
         [3, 3, 1, 3, 1, 3, 3, 1], [3, 3, 1, 3, 3, 1, 1, 3], [3, 3, 1, 3, 1, 3, 1, 3],
         [3, 3, 1, 3, 1, 1, 3, 3], [3, 1, 3, 3, 3, 3, 1, 1], [3, 1, 3, 3, 3, 1, 3, 1],
         [3, 1, 3, 3, 1, 3, 3, 1], [3, 1, 3, 3, 3, 1, 1, 3], [3, 1, 3, 3, 1, 3, 1, 3],
         [1, 3, 3, 3, 1, 1, 3, 3], [1, 3, 3, 3, 3, 3, 1, 1], [1, 3, 3, 3, 3, 1, 3, 1],
         [1, 3, 3, 3, 1, 3, 3, 1], [1, 3, 3, 3, 3, 1, 1, 3], [1, 3, 3, 3, 1, 3, 1, 3],
         [1, 1, 3, 3, 1, 3, 3, 3], [3, 3, 1, 1, 3, 3, 3, 1]],
        dtype=np.float64) / 2


def _get_packed_abs_grid():
    # Exact but memory-lean equivalent of the torch 8^8 enumeration: the set of unique
    # |d8 + 1/2| rows with even coordinate sum and norm^2 <= 10 equals the set of rows of
    # {0.5,1.5,2.5,3.5}^8 with norm^2 <= 10 (flipping one sign toggles the sum parity, so a
    # valid signed representative always exists).  np.unique sorts lexicographically, which
    # matches torch.unique(dim=0) ordering.
    vals = np.array([0.5, 1.5, 2.5, 3.5])
    g = np.stack(np.meshgrid(*([vals] * 8), indexing="ij"), axis=-1).reshape(-1, 8)
    d8abs = np.unique(g[(g * g).sum(axis=-1) <= 10.0], axis=0)
    cba = np.concatenate([d8abs, _get_norm12()], axis=0)
    cba = cba[:, [0, 2, 4, 6, 1, 3, 5, 7]]
    cba[:, 7] = cba[:, 7] * (1 - 2 * (cba.sum(axis=1) % 2))
    cba = (cba * 2 + 8).astype(np.int64)
    acc = cba[:, 0].copy()
    for i in range(7):
        acc = acc | (cba[:, i + 1] << ((i + 1) * 4))
    assert acc.shape[0] == 256
    return acc.astype(np.uint32).view(np.int32)   # same bit pattern as the torch int32 buffer


# ----------------------------------------------------------------------------------
# Packing of 16-bit E8P indices (mirrors E8P12_codebook.maybe_pack_idxs)
# ----------------------------------------------------------------------------------
def pack_idxs(idxs):
    m, ncw = idxs.shape
    p = idxs.astype(np.uint64).reshape(m // 2, 2, ncw // 2, 2).transpose(0, 2, 1, 3)
    abs32 = ((p[:, :, 0, 0] >> 8) + ((p[:, :, 1, 0] >> 8) << 8)
             + ((p[:, :, 0, 1] >> 8) << 16) + ((p[:, :, 1, 1] >> 8) << 24))
    sign32 = np.zeros_like(abs32)
    for i in range(4):
        wt = p[:, :, i % 2, i // 2]
        for j in range(8):
            sign32 = sign32 + (((wt >> j) & 1) << (4 * j + i))
    out = (sign32 << 32) + abs32
    out = out.reshape(m // 16, 8, ncw // 8, 4).transpose(0, 2, 1, 3)
    return out.reshape(m, ncw // 4)                      # uint64, bit pattern of torch int64 Qidxs


def _qidxs_to_planes(qidxs, m, n):
    ncw = n // _E8P_CODESZ
    q4 = np.asarray(qidxs).reshape(m // 16, n // 64, 8, 4)        # view used by the torch forward
    prp = q4.transpose(0, 2, 1, 3).reshape(m // 2, ncw // 2)      # [row_pair, col_pair]
    abs32 = (prp & np.uint64(0xFFFFFFFF)).astype(np.uint32)
    sign32 = (prp >> np.uint64(32)).astype(np.uint32)
    return abs32, sign32


def _qidxs_to_signed_nibbles(qidxs, m, n, gp_i32):
    """Weight-only host repack: packed E8P codes -> per-codeword signed-nibble planes.

    Returns W4T of shape (n//8, m) int32 where nibble k of W4T[c, row] is the signed 4-bit
    integer q such that  W[row, 8*c + k] = 0.25 * q.  The codebook lookup, the interleaved
    sign bits, the parity shift and the [0,2,4,6,1,3,5,7] lane permutation are all folded in
    here (weight preprocessing analogous to maybe_pack_idxs; cache it in real deployments).
    """
    ncw = n // _E8P_CODESZ
    abs32, sign32 = _qidxs_to_planes(qidxs, m, n)        # (m//2, n//16) uint32 planes
    gp = np.asarray(gp_i32).view(np.uint32)
    out = np.zeros((m, ncw), np.uint32)
    for ci in range(4):                                  # ci = rw + 2*cw
        rw, cw = ci & 1, ci >> 1
        a = ((abs32 >> np.uint32(8 * ci)) & np.uint32(0xFF)).astype(np.int64)
        bits = [((sign32 >> np.uint32(4 * j + ci)) & np.uint32(1)).astype(np.int64)
                for j in range(8)]
        s = np.zeros_like(bits[0])
        par = np.zeros_like(bits[0])
        for j in range(8):
            s = s | (bits[j] << j)
            par = par ^ bits[j]
        s_eff = s ^ par                                  # sign byte with parity folded into bit 0
        code = gp[a].astype(np.int64)                    # packed abs nibbles (8 x 4 bits)
        packed = np.zeros(a.shape, np.uint32)
        for k in range(8):
            sk = (k >> 1) | ((k & 1) << 2)               # codebook lane permutation
            nib = (code >> (4 * sk)) & 15
            sb = (s_eff >> sk) & 1
            q = (nib - 8) * (1 - 2 * sb) - par           # = 4 * decoded weight, in [-8, 7]
            assert q.min() >= -8 and q.max() <= 7
            packed |= ((q & 15).astype(np.uint32)) << np.uint32(4 * k)
        out[rw::2, cw::2] = packed
    return np.ascontiguousarray(out.T).view(np.int32)    # (n//8, m), lane-dense in m


def _sylvester_hadamard(k):
    h = np.array([[1.0]])
    while h.shape[0] < k:
        h = np.block([[h, h], [h, -h]])
    return h


# ----------------------------------------------------------------------------------
# Helpers (tiling / device / transforms)
# ----------------------------------------------------------------------------------
def _round_up(x, mult):
    return -(-int(x) // mult) * mult


def _device_kind():
    try:
        return jax.devices()[0].device_kind.lower()
    except Exception:
        return ""


def _pick_tile_m(m_pad, tile_m, device_kind):
    if tile_m is not None:
        tm = int(tile_m)
        assert tm % 128 == 0 and m_pad % tm == 0
        return tm
    cands = [256, 128]
    if "v6" in device_kind and m_pad % 512 == 0:
        cands = [512] + cands                    # v6e: 512-wide N tile feeds both 256x256 MXUs
    best = None
    for c in cands:
        if m_pad % c == 0:
            if best is None:
                best = c
            if m_pad // c >= 2:                  # keep >=2 m-tiles so megacore can split m
                return c
    return best if best is not None else 128


def _pick_tile_k(ncw, tile_k):
    if tile_k is not None:
        tk = int(tile_k)
        assert ncw % tk == 0 and (tk == ncw or tk % 16 == 0)
        return tk
    if ncw <= 512:
        return ncw                               # single K chunk for small/moderate n
    for cand in range(512, 15, -16):
        if ncw % cand == 0:
            return cand
    return ncw


def _vmem_limit_bytes(tr, tk, tm, wbuf):
    # Derived from the tile sizes (v7x has only 64 MiB VMEM / TC, so no fixed 32 MiB guess).
    xp_b = tr * 8 * tk * 2
    w4_b = tk * tm * 4
    out_b = tr * tm * 2
    acc_b = tr * tm * 4
    dec_b = tk * tm * 6 * 2                      # decoded int32 + bf16 component temporaries
    est = 2 * xp_b + max(2, wbuf) * w4_b + 2 * out_b + acc_b + dec_b
    return int(min(max(est + (8 << 20), 16 << 20), 60 << 20))


def _weight_block_spec(tk, tm, buffer_count):
    imap = lambda j, r, k: (k, j)
    if buffer_count and buffer_count > 2 and hasattr(pl, "Buffered"):
        try:  # deeper weight prefetch (v5e small-batch path); fall back if unsupported
            return pl.BlockSpec((tk, tm), imap, pipeline_mode=pl.Buffered(int(buffer_count)))
        except TypeError:
            pass
    return pl.BlockSpec((tk, tm), imap)


def _apply_hadamard(x, had, scale, use_fwht=True):
    """(x @ had) * scale.  For power-of-two dims a factored fast Walsh-Hadamard transform
    (H_n = H_a kron H_b -> two tiny matmuls) is used so no dense (d,d) constant is built.
    TODO(synk): the FWHT path assumes `had` is the Sylvester Hadamard (QuIP# K==1 path)."""
    r, d = x.shape
    if use_fwht and (d & (d - 1)) == 0:
        b = 1 << ((d.bit_length() - 1) // 2)
        a = d // b
        ha = jnp.asarray(_sylvester_hadamard(a), jnp.float32)
        hb = jnp.asarray(_sylvester_hadamard(b), jnp.float32) * scale
        t = x.reshape(r, a, b)
        t = jnp.einsum("xab,bc->xac", t, hb)
        t = jnp.einsum("xab,ad->xdb", t, ha)
        return t.reshape(r, d)
    # Dense fallback (non power-of-two); small in practice.
    return (x @ jnp.asarray(had, jnp.float32)) * scale


# ----------------------------------------------------------------------------------
# Pallas kernel: signed-nibble decode fused with MXU dot accumulation
# ----------------------------------------------------------------------------------
def _make_e8p_kernel(tk, per_component):
    def kernel(xp_ref, w4_ref, out_ref, acc_ref):
        # xp_ref : (TR, 8*TK) bf16  activations after SU, left Hadamard, 0.25*Wscale and the
        #                           chunk-major component permutation.
        # w4_ref : (TK, TM)   int32 8 signed 4-bit weight components per codeword.
        # out_ref: (TR, TM)   bf16  y = Wscale * (x_had @ W^T) tile (written on last K step).
        # acc_ref: (TR, TM)   f32   VMEM accumulator across the K (codeword) grid axis.
        ki = pl.program_id(2)

        @pl.when(ki == 0)
        def _init():
            acc_ref[...] = jnp.zeros_like(acc_ref)

        w4 = w4_ref[...]
        if per_component:
            # Never materialize the (8*TK, TM) decoded weight: 8 partial dots, each using a
            # contiguous lane-aligned slice of xp; VPU decode of component c+1 overlaps the
            # MXU push of component c.
            for c in range(8):
                comp = ((w4 << (28 - 4 * c)) >> 28).astype(jnp.bfloat16)   # sign-extended nibble
                acc_ref[...] += jnp.dot(xp_ref[:, c * tk:(c + 1) * tk], comp,
                                        preferred_element_type=jnp.float32)
        else:
            # Small-chunk fallback: cast each component to bf16 BEFORE concatenating.
            comps = [((w4 << (28 - 4 * c)) >> 28).astype(jnp.bfloat16) for c in range(8)]
            w = jnp.concatenate(comps, axis=0)                             # (8*TK, TM) bf16
            acc_ref[...] += jnp.dot(xp_ref[...], w, preferred_element_type=jnp.float32)

        @pl.when(ki == pl.num_programs(2) - 1)
        def _store():
            out_ref[...] = acc_ref[...].astype(out_ref.dtype)

    return kernel


# ----------------------------------------------------------------------------------
# Wrapper: host repack, fast Hadamard / scale / permutation in XLA, tiled pallas_call
# ----------------------------------------------------------------------------------
def quantized_e8p12_linear(input, Qidxs, SU, SV, Wscale, had_left, had_right,
                           grid_packed_abs, K_left=1, K_right=1, *,
                           tile_m=None, tile_rows=256, tile_k=None,
                           per_component_threshold=128,
                           weight_buffer_count=None,
                           use_fwht=True,
                           w4_packed=None):
    assert K_left == 1 and K_right == 1   # TODO(synk): K>1 (non power-of-two Hadamard) unsupported
    n = int(np.asarray(SU).shape[0])
    m = int(np.asarray(SV).shape[0])
    assert n % 64 == 0 and m % 16 == 0
    ncw = n // _E8P_CODESZ

    lead = tuple(input.shape[:-1])
    nrows = int(np.prod(lead)) if lead else 1
    kind = _device_kind()

    # ---- tile selection ----
    m_pad = _round_up(m, 128)                       # keep output lane-dense (tm >= 128)
    tm = _pick_tile_m(m_pad, tile_m, kind)
    tk = _pick_tile_k(ncw, tile_k)
    nck = ncw // tk
    tile_rows = max(16, _round_up(tile_rows, 16))
    tr = max(16, _round_up(nrows, 16)) if nrows <= tile_rows else tile_rows   # bf16 sublane = 16
    r_pad = _round_up(nrows, tr)
    per_component = (tk % 128 == 0) and (tk >= int(per_component_threshold))
    if weight_buffer_count is None:                 # v5e small-batch: deeper weight prefetch
        weight_buffer_count = 3 if (nrows <= 64 and ("v5e" in kind or "v5 lite" in kind)) else 2

    # ---- weight-only preprocessing (numpy; cache w4_packed in real deployments) ----
    if w4_packed is None:
        w4_np = _qidxs_to_signed_nibbles(Qidxs, m, n, grid_packed_abs)      # (ncw, m) int32
    else:
        w4_np = np.asarray(w4_packed)
    if m_pad != m:
        w4_np = np.pad(w4_np, ((0, 0), (0, m_pad - m)))
    w4 = jnp.asarray(w4_np, dtype=jnp.int32)

    # ---- activation preprocessing (SU, fast left Hadamard, scale, chunk-major perm) ----
    x2 = jnp.asarray(input).reshape(nrows, n).astype(jnp.float32)
    if r_pad != nrows:
        x2 = jnp.pad(x2, ((0, r_pad - nrows), (0, 0)))
    su = jnp.asarray(SU).reshape(1, n).astype(jnp.float32)
    sv = jnp.asarray(SV).reshape(1, m).astype(jnp.float32)
    left_scale = jnp.asarray(Wscale, jnp.float32) * jnp.float32(0.25 / math.sqrt(n))
    xh = _apply_hadamard(x2 * su, had_left, left_scale, use_fwht)
    # chunk-major component permutation: col ki*8*tk + c*tk + t  <-  original col 8*(ki*tk+t)+c
    xp = xh.reshape(r_pad, nck, tk, 8).transpose(0, 1, 3, 2).reshape(r_pad, n)
    xp = xp.astype(jnp.bfloat16)

    # ---- Pallas decode + GEMM over a (m, rows, K) grid ----
    grid = (m_pad // tm, r_pad // tr, nck)
    grid_spec = pltpu.PrefetchScalarGridSpec(
        num_scalar_prefetch=0,
        grid=grid,
        in_specs=[
            pl.BlockSpec((tr, 8 * tk), lambda j, r, k: (r, k)),   # activations (chunk-major)
            _weight_block_spec(tk, tm, weight_buffer_count),       # signed-nibble weights
        ],
        out_specs=pl.BlockSpec((tr, tm), lambda j, r, k: (r, j)),
        scratch_shapes=[pltpu.VMEM((tr, tm), jnp.float32)],
    )

    call_kwargs = dict(out_shape=jax.ShapeDtypeStruct((r_pad, m_pad), jnp.bfloat16),
                       grid_spec=grid_spec)
    if _CompilerParamsCls is not None:
        try:
            call_kwargs["compiler_params"] = _CompilerParamsCls(
                dimension_semantics=("parallel", "parallel", "arbitrary"),
                vmem_limit_bytes=_vmem_limit_bytes(tr, tk, tm, weight_buffer_count))
        except TypeError:
            call_kwargs["compiler_params"] = _CompilerParamsCls(
                dimension_semantics=("parallel", "parallel", "arbitrary"))
    if hasattr(pl, "CostEstimate"):
        call_kwargs["cost_estimate"] = pl.CostEstimate(
            flops=2 * r_pad * n * m_pad, transcendentals=0,
            bytes_accessed=r_pad * n * 2 + ncw * m_pad * 4 + r_pad * m_pad * 2)

    kernel = _make_e8p_kernel(tk, per_component)
    try:
        fn = pl.pallas_call(kernel, **call_kwargs)
    except TypeError:
        call_kwargs.pop("cost_estimate", None)
        fn = pl.pallas_call(kernel, **call_kwargs)
    y = fn(xp, w4)

    # ---- right Hadamard + SV (fast WHT for power-of-two m; no dense (m,m) constant) ----
    y = y[:nrows, :m].astype(jnp.float32)
    y = _apply_hadamard(y, had_right, jnp.float32(1.0 / math.sqrt(m)), use_fwht)
    y = y * sv
    return y.reshape(*lead, m)


# ----------------------------------------------------------------------------------
# Plain numpy reference (decodes the full W from the unpacked idxs)
# ----------------------------------------------------------------------------------
def _decode_idxs(idxs, gp_i32):
    gp = np.asarray(gp_i32).view(np.uint32).astype(np.uint64)
    idxs = np.asarray(idxs).astype(np.int64)
    signs = idxs & 255
    absidx = idxs >> 8
    bits = (signs[..., None] >> np.arange(8)) & 1
    parity = bits.sum(-1) & 1
    signs_eff = signs ^ parity
    code = gp[absidx]
    out = np.zeros(idxs.shape + (8,), np.float32)
    for k in range(8):
        sk = (k >> 1) | ((k & 1) << 2)
        nib = (code >> np.uint64(4 * sk)) & np.uint64(15)
        sb = ((signs_eff >> sk) & 1).astype(np.float32)
        out[..., k] = (nib.astype(np.float32) - 8.0) * 0.25 * (1.0 - 2.0 * sb)
    out -= 0.25 * parity[..., None].astype(np.float32)
    return out


def _reference_forward(x_in, idxs, su, sv, wscale, had_left, had_right, gp):
    n, m = su.shape[0], sv.shape[0]
    W = _decode_idxs(idxs, gp).reshape(m, n)
    x2 = np.asarray(x_in).reshape(-1, n).astype(np.float32) * np.asarray(su)
    xh = x2 @ (np.asarray(had_left).astype(np.float32) / np.sqrt(n))
    y = (xh @ W.T) * float(wscale)
    y = y @ (np.asarray(had_right).astype(np.float32) / np.sqrt(m))
    y = y * np.asarray(sv)
    return y.reshape(tuple(x_in.shape[:-1]) + (m,))


# ----------------------------------------------------------------------------------
# Demo / self-test
# ----------------------------------------------------------------------------------
if __name__ == "__main__":
    gp = _get_packed_abs_grid()

    def _run_case(seed, n, m, lead, **kwargs):
        key = jax.random.fold_in(jax.random.PRNGKey(0), seed)
        k1, k2, k3, k4, k5 = jax.random.split(key, 5)
        x_in = jax.random.normal(k1, lead + (n,), jnp.float32)
        su = jnp.where(jax.random.bernoulli(k2, 0.5, (n,)), 1.0, -1.0).astype(jnp.float32)
        sv = jnp.where(jax.random.bernoulli(k3, 0.5, (m,)), 1.0, -1.0).astype(jnp.float32)
        wscale = float(jax.random.uniform(k4, (), jnp.float32, 0.5, 1.5))
        idxs = np.asarray(jax.random.randint(k5, (m, n // _E8P_CODESZ), 0, 1 << 16, jnp.int32))
        qidxs = pack_idxs(idxs)

        def _had(d, rk):
            if (d & (d - 1)) == 0:
                return _sylvester_hadamard(d)
            # non power-of-two: any fixed +-1 matrix exercises the dense fallback path
            rng = np.random.RandomState(rk)
            return np.where(rng.rand(d, d) < 0.5, 1.0, -1.0)

        had_left = _had(n, 11)
        had_right = _had(m, 13)

        out = quantized_e8p12_linear(x_in, qidxs, su, sv, wscale, had_left, had_right,
                                     gp, K_left=1, K_right=1, **kwargs)
        out = jax.block_until_ready(out)

        ref = _reference_forward(np.asarray(x_in), idxs, np.asarray(su), np.asarray(sv),
                                 wscale, had_left, had_right, gp)
        assert np.asarray(out).shape == ref.shape
        rel = np.linalg.norm(np.asarray(out, np.float64) - ref) / (np.linalg.norm(ref) + 1e-6)
        assert rel < 5e-2, f"case {seed}: relative error too large: {rel}"

    # Case A: small canonical shapes; single K chunk -> fused concat decode path, FWHT both sides.
    _run_case(1, n=256, m=256, lead=(2, 4))
    # Case B: exercises K-tiling (2 chunks), per-component dot accumulation, row padding
    # (40 -> 48, three row tiles), three m tiles and the dense non-power-of-two right Hadamard.
    _run_case(2, n=2048, m=384, lead=(40,), tile_k=128, tile_rows=16)

    print("KERNEL_OK")
</pallas_src>

<mosaic_0001>
module attributes {stable_mosaic.version = 11 : i64} {
  func.func @kernel(%arg0: i32, %arg1: i32, %arg2: i32, %arg3: memref<16x256xbf16, #tpu.memory_space<vmem>>, %arg4: memref<32x128xi32, #tpu.memory_space<vmem>>, %arg5: memref<16x128xbf16, #tpu.memory_space<vmem>>, %arg6: memref<16x128xf32, #tpu.memory_space<vmem>>) attributes {dimension_semantics = [#tpu.dimension_semantics<parallel>, #tpu.dimension_semantics<parallel>, #tpu.dimension_semantics<arbitrary>], iteration_bounds = array<i64: 2, 1, 1>, scalar_prefetch = 0 : i64, scratch_operands = 1 : i64, tpu.core_type = #tpu.core_type<tc>, window_params = [{transform_indices = @transform_0, window_bounds = array<i64: 16, 256>}, {transform_indices = @transform_1, window_bounds = array<i64: 32, 128>}, {transform_indices = @transform_2, window_bounds = array<i64: 16, 128>}]} {
    %c0_i32 = arith.constant 0 : i32
    %0 = arith.cmpi eq, %arg2, %c0_i32 : i32
    %1 = arith.extui %0 : i1 to i32
    %c0_i32_0 = arith.constant 0 : i32
    %2 = arith.cmpi ne, %1, %c0_i32_0 : i32
    scf.if %2 {
      %cst_19 = arith.constant 0.000000e+00 : f32
      %53 = vector.broadcast %cst_19 : f32 to vector<16x128xf32>
      %c0_20 = arith.constant 0 : index
      %c0_21 = arith.constant 0 : index
      %54 = vector.load %arg6[%c0_20, %c0_21] : memref<16x128xf32, #tpu.memory_space<vmem>>, vector<16x128xf32>
      tpu.vector_store %arg6[%c0_20, %c0_21], %53 {strides = array<i32>} : memref<16x128xf32, #tpu.memory_space<vmem>>, vector<16x128xf32>,
    } else {
    }
    %c0 = arith.constant 0 : index
    %c0_1 = arith.constant 0 : index
    %3 = vector.load %arg4[%c0, %c0_1] : memref<32x128xi32, #tpu.memory_space<vmem>>, vector<32x128xi32>
    %c28_i32 = arith.constant 28 : i32
    %4 = vector.broadcast %c28_i32 : i32 to vector<32x128xi32>
    %5 = arith.shli %3, %4 : vector<32x128xi32>
    %c28_i32_2 = arith.constant 28 : i32
    %6 = vector.broadcast %c28_i32_2 : i32 to vector<32x128xi32>
    %7 = arith.shrsi %5, %6 : vector<32x128xi32>
    %8 = arith.sitofp %7 : vector<32x128xi32> to vector<32x128xbf16>
    %c24_i32 = arith.constant 24 : i32
    %9 = vector.broadcast %c24_i32 : i32 to vector<32x128xi32>
    %10 = arith.shli %3, %9 : vector<32x128xi32>
    %c28_i32_3 = arith.constant 28 : i32
    %11 = vector.broadcast %c28_i32_3 : i32 to vector<32x128xi32>
    %12 = arith.shrsi %10, %11 : vector<32x128xi32>
    %13 = arith.sitofp %12 : vector<32x128xi32> to vector<32x128xbf16>
    %c20_i32 = arith.constant 20 : i32
    %14 = vector.broadcast %c20_i32 : i32 to vector<32x128xi32>
    %15 = arith.shli %3, %14 : vector<32x128xi32>
    %c28_i32_4 = arith.constant 28 : i32
    %16 = vector.broadcast %c28_i32_4 : i32 to vector<32x128xi32>
    %17 = arith.shrsi %15, %16 : vector<32x128xi32>
    %18 = arith.sitofp %17 : vector<32x128xi32> to vector<32x128xbf16>
    %c16_i32 = arith.constant 16 : i32
    %19 = vector.broadcast %c16_i32 : i32 to vector<32x128xi32>
    %20 = arith.shli %3, %19 : vector<32x128xi32>
    %c28_i32_5 = arith.constant 28 : i32
    %21 = vector.broadcast %c28_i32_5 : i32 to vector<32x128xi32>
    %22 = arith.shrsi %20, %21 : vector<32x128xi32>
    %23 = arith.sitofp %22 : vector<32x128xi32> to vector<32x128xbf16>
    %c12_i32 = arith.constant 12 : i32
    %24 = vector.broadcast %c12_i32 : i32 to vector<32x128xi32>
    %25 = arith.shli %3, %24 : vector<32x128xi32>
    %c28_i32_6 = arith.constant 28 : i32
    %26 = vector.broadcast %c28_i32_6 : i32 to vector<32x128xi32>
    %27 = arith.shrsi %25, %26 : vector<32x128xi32>
    %28 = arith.sitofp %27 : vector<32x128xi32> to vector<32x128xbf16>
    %c8_i32 = arith.constant 8 : i32
    %29 = vector.broadcast %c8_i32 : i32 to vector<32x128xi32>
    %30 = arith.shli %3, %29 : vector<32x128xi32>
    %c28_i32_7 = arith.constant 28 : i32
    %31 = vector.broadcast %c28_i32_7 : i32 to vector<32x128xi32>
    %32 = arith.shrsi %30, %31 : vector<32x128xi32>
    %33 = arith.sitofp %32 : vector<32x128xi32> to vector<32x128xbf16>
    %c4_i32 = arith.constant 4 : i32
    %34 = vector.broadcast %c4_i32 : i32 to vector<32x128xi32>
    %35 = arith.shli %3, %34 : vector<32x128xi32>
    %c28_i32_8 = arith.constant 28 : i32
    %36 = vector.broadcast %c28_i32_8 : i32 to vector<32x128xi32>
    %37 = arith.shrsi %35, %36 : vector<32x128xi32>
    %38 = arith.sitofp %37 : vector<32x128xi32> to vector<32x128xbf16>
    %c0_i32_9 = arith.constant 0 : i32
    %39 = vector.broadcast %c0_i32_9 : i32 to vector<32x128xi32>
    %40 = arith.shli %3, %39 : vector<32x128xi32>
    %c28_i32_10 = arith.constant 28 : i32
    %41 = vector.broadcast %c28_i32_10 : i32 to vector<32x128xi32>
    %42 = arith.shrsi %40, %41 : vector<32x128xi32>
    %43 = arith.sitofp %42 : vector<32x128xi32> to vector<32x128xbf16>
    %44 = tpu.concatenate %8, %13, %18, %23, %28, %33, %38, %43 in 0 : vector<32x128xbf16>, vector<32x128xbf16>, vector<32x128xbf16>, vector<32x128xbf16>, vector<32x128xbf16>, vector<32x128xbf16>, vector<32x128xbf16>, vector<32x128xbf16> -> vector<256x128xbf16>
    %c0_11 = arith.constant 0 : index
    %c0_12 = arith.constant 0 : index
    %45 = vector.load %arg6[%c0_11, %c0_12] : memref<16x128xf32, #tpu.memory_space<vmem>>, vector<16x128xf32>
    %c0_13 = arith.constant 0 : index
    %c0_14 = arith.constant 0 : index
    %46 = vector.load %arg3[%c0_13, %c0_14] : memref<16x256xbf16, #tpu.memory_space<vmem>>, vector<16x256xbf16>
    %cst = arith.constant dense<0.000000e+00> : vector<16x128xf32>
    %47 = tpu.matmul %46, %44, %cst {dimension_numbers = #tpu.dot_dimension_numbers<[1], [0], [0], [1], [0, 0, 1, 1], [], []>} : vector<16x256xbf16>, vector<256x128xbf16>, vector<16x128xf32> -> vector<16x128xf32>
    %48 = arith.addf %45, %47 : vector<16x128xf32>
    %c0_15 = arith.constant 0 : index
    %c0_16 = arith.constant 0 : index
    %49 = vector.load %arg6[%c0_15, %c0_16] : memref<16x128xf32, #tpu.memory_space<vmem>>, vector<16x128xf32>
    tpu.vector_store %arg6[%c0_15, %c0_16], %48 {strides = array<i32>} : memref<16x128xf32, #tpu.memory_space<vmem>>, vector<16x128xf32>,
    %c0_i32_17 = arith.constant 0 : i32
    %50 = arith.cmpi eq, %arg2, %c0_i32_17 : i32
    %51 = arith.extui %50 : i1 to i32
    %c0_i32_18 = arith.constant 0 : i32
    %52 = arith.cmpi ne, %51, %c0_i32_18 : i32
    scf.if %52 {
      %c0_19 = arith.constant 0 : index
      %c0_20 = arith.constant 0 : index
      %53 = vector.load %arg6[%c0_19, %c0_20] : memref<16x128xf32, #tpu.memory_space<vmem>>, vector<16x128xf32>
      %54 = arith.truncf %53 : vector<16x128xf32> to vector<16x128xbf16>
      %c0_21 = arith.constant 0 : index
      %c0_22 = arith.constant 0 : index
      %55 = vector.load %arg5[%c0_21, %c0_22] : memref<16x128xbf16, #tpu.memory_space<vmem>>, vector<16x128xbf16>
      tpu.vector_store %arg5[%c0_21, %c0_22], %54 {strides = array<i32>} : memref<16x128xbf16, #tpu.memory_space<vmem>>, vector<16x128xbf16>,
    } else {
    }
    return
  }
  func.func @transform_0(%arg0: i32, %arg1: i32, %arg2: i32) -> (i32, i32) {
    %c0_i32 = arith.constant 0 : i32
    return %arg1, %arg2 : i32, i32
  }
  func.func @transform_1(%arg0: i32, %arg1: i32, %arg2: i32) -> (i32, i32) {
    %c0_i32 = arith.constant 0 : i32
    return %arg2, %arg0 : i32, i32
  }
  func.func @transform_2(%arg0: i32, %arg1: i32, %arg2: i32) -> (i32, i32) {
    %c0_i32 = arith.constant 0 : i32
    return %arg1, %arg0 : i32, i32
  }
}

</mosaic_0001>

<llo_original>
// kernel: tpu_custom_call.1
$region0: #{tpu_custom_call.1}
  #allocation0 [shape = 'u32[]', space=smem, size = 0x4, offset = 0x4, fixed_abs, tag = 'smem constant byte address 0x4 - core index']
  #allocation1 [shape = 'u32[144,128]{1,0:T(1,128)}', space=vmem, size = 0x12000, scoped, tag = 'internal scratch']
  #allocation2 [shape = 'f32[16,128]{1,0:T(8,128)}', space=vmem, size = 0x2000, scoped, tag = 'scratch operand']
  %s0 = inlined_call_operand.hbm [shape: bf16[16,256], index: 0, kind: input, shape index: {}]
  %s1 = inlined_call_operand.hbm [shape: s32[32,256], index: 1, kind: input, shape index: {}]
  %s2 = inlined_call_operand.hbm [shape: bf16[16,256], index: 2, kind: output, shape index: {}]
  %s3 = sld [smem:[#allocation0]]
  $region57: #{tpu_custom_call.1} parent=0
    _
  %s5 = ssub.s32 1, %s3
  %s6 = scalar_select 0, %s5, %s3
  $region1: #{tpu_custom_call.1} parent=0
    #allocation3 [shape = 'u8[8192]{0}', space=vmem, size = 0x2000, scoped, tag = 'input window, operand 0, single buffered']
    #allocation4 [shape = 's32[2]{0}', space=sflag, size = 0x8, scoped, tag = 'scoped memory for tpu_custom_call.1']
    #allocation5 [shape = 's32[2]{0}', space=sflag, size = 0x8, scoped, tag = 'scoped memory for tpu_custom_call.1']
    #allocation6 [shape = 'u8[32768]{0}', space=vmem, size = 0x8000, scoped, tag = 'input window, operand 1']
    #allocation7 [shape = 's32[2]{0}', space=sflag, size = 0x8, scoped, tag = 'scoped memory for tpu_custom_call.1']
    #allocation8 [shape = 'u8[8192]{0}', space=vmem, size = 0x2000, scoped, tag = 'output window, operand 0']
    %7 = vsyncpa [#allocation4], 0
    %8 = vsyncpa [#allocation7], 0
    %s9 = scalar_lea.sflag [#allocation7], 1
    %10 = vsyncpa %s9, 0
    %11 = vsyncpa [#allocation5], 0
    %s12 = scalar_lea.sflag [#allocation5], 1
    %13 = vsyncpa %s12, 0
    loop: start=0, step=1, limit=4
    $region2: #{tpu_custom_call.1} parent=1 // loop_pre_header
      _
    $region3: #{tpu_custom_call.1} parent=1 // loop_header
      %s15 = sphi 0, %s19
      %p16 = scmp.ge.s32.totalorder %s15, 4
      %s22 = sphi 0, %s41
      %s23 = sphi 0, %s37
      %s24 = sphi 0, %s33
      %s25 = sphi 0, %s22
      %s26 = sphi 0, %s23
      %s27 = sphi 0, %s24
      %s28 = sphi 0, %s25
      %s29 = sphi 0, %s26
      %s30 = sphi 0, %s27
      %s46 = sphi 0, %s48
      %s49 = sphi 0, %s46
      %s50 = sphi 0, %s49
      %s66 = sphi 0, %s50
      %s74 = sphi 0, %s76
      %s77 = sphi 0, %s74
      %s78 = sphi 0, %s77
      %s94 = sphi 0, %s78
      %s102 = sphi 0, %s104
      %s105 = sphi 0, %s102
      %s106 = sphi 0, %s105
      %s122 = sphi 0, %s106
    $region4: #{tpu_custom_call.1} parent=1 // loop_header_branch
      %18 = sbr.rel (%p16) target = $region8
    $region5: #{tpu_custom_call.1} parent=1 // loop_body
      %s20 = ssub.s32 %s15, 1
      %s21 = ssub.s32 %s15, 2
      %s31 = sadd.s32 1, %s24
      %p32 = scmp.ge.s32.totalorder %s31, 1
      %s33 = scalar_select %p32, 0, %s31
      %s34 = sadd.s32 1, %s23
      %s35 = scalar_select %p32, %s34, %s23
      %p36 = scmp.ge.s32.totalorder %s35, 1
      %s37 = scalar_select %p36, 0, %s35
      %s38 = sadd.s32 1, %s22
      %s39 = scalar_select %p36, %s38, %s22
      %p40 = scmp.ge.s32.totalorder %s39, 2
      %s41 = scalar_select %p40, 0, %s39
      %s42 = ssub.s32 %s23, %s37
      %s43 = ssub.s32 %s24, %s33
      %s44 = sor.u32 %s42, %s43
      %p45 = scmp.eq.s32.totalorder %s44, 0
      %s47 = sadd.s32 %s46, 1
      %s48 = scalar_select %p45, %s46, %s47
      %p51 = pneg %p45
      %p52 = scmp.eq.s32.totalorder %s15, 1
      %p53 = por %p51, %p52
      %p54 = scmp.ne.s32.totalorder %s46, %s49
      %p55 = scmp.eq.s32.totalorder %s15, 0
      %p56 = por %p54, %p55
      %p57 = scmp.ne.s32.totalorder %s46, %s49
      %p58 = scmp.eq.s32.totalorder %s20, 1
      %p59 = por %p57, %p58
      %p60 = scmp.ne.s32.totalorder %s49, %s50
      %p61 = scmp.eq.s32.totalorder %s20, 0
      %p62 = por %p60, %p61
      %p63 = scmp.ne.s32.totalorder %s49, %s50
      %p64 = scmp.eq.s32.totalorder %s21, 1
      %p65 = por %p63, %p64
      %p67 = scmp.ne.s32.totalorder %s50, %s66
      %p68 = scmp.eq.s32.totalorder %s21, 0
      %p69 = por %p67, %p68
      %s70 = ssub.s32 %s24, %s33
      %s71 = ssub.s32 %s22, %s41
      %s72 = sor.u32 %s70, %s71
      %p73 = scmp.eq.s32.totalorder %s72, 0
      %s75 = sadd.s32 %s74, 1
      %s76 = scalar_select %p73, %s74, %s75
      %p79 = pneg %p73
      %p80 = scmp.eq.s32.totalorder %s15, 1
      %p81 = por %p79, %p80
      %p82 = scmp.ne.s32.totalorder %s74, %s77
      %p83 = scmp.eq.s32.totalorder %s15, 0
      %p84 = por %p82, %p83
      %p85 = scmp.ne.s32.totalorder %s74, %s77
      %p86 = scmp.eq.s32.totalorder %s20, 1
      %p87 = por %p85, %p86
      %p88 = scmp.ne.s32.totalorder %s77, %s78
      %p89 = scmp.eq.s32.totalorder %s20, 0
      %p90 = por %p88, %p89
      %p91 = scmp.ne.s32.totalorder %s77, %s78
      %p92 = scmp.eq.s32.totalorder %s21, 1
      %p93 = por %p91, %p92
      %p95 = scmp.ne.s32.totalorder %s78, %s94
      %p96 = scmp.eq.s32.totalorder %s21, 0
      %p97 = por %p95, %p96
      %s98 = ssub.s32 %s23, %s37
      %s99 = ssub.s32 %s22, %s41
      %s100 = sor.u32 %s98, %s99
      %p101 = scmp.eq.s32.totalorder %s100, 0
      %s103 = sadd.s32 %s102, 1
      %s104 = scalar_select %p101, %s102, %s103
      %p107 = pneg %p101
      %p108 = scmp.eq.s32.totalorder %s15, 1
      %p109 = por %p107, %p108
      %p110 = scmp.ne.s32.totalorder %s102, %s105
      %p111 = scmp.eq.s32.totalorder %s15, 0
      %p112 = por %p110, %p111
      %p113 = scmp.ne.s32.totalorder %s102, %s105
      %p114 = scmp.eq.s32.totalorder %s20, 1
      %p115 = por %p113, %p114
      %p116 = scmp.ne.s32.totalorder %s105, %s106
      %p117 = scmp.eq.s32.totalorder %s20, 0
      %p118 = por %p116, %p117
      %p119 = scmp.ne.s32.totalorder %s105, %s106
      %p120 = scmp.eq.s32.totalorder %s21, 1
      %p121 = por %p119, %p120
      %p123 = scmp.ne.s32.totalorder %s106, %s122
      %p124 = scmp.eq.s32.totalorder %s21, 0
      %p125 = por %p123, %p124
      %p126 = scmp.le.s32.totalorder 1, %s15
      %p127 = scmp.lt.s32.totalorder %s15, 3
      %p128 = pnand %p126, %p127
      %p129 = pneg %p128
      // Predicated region
      $region9: #{tpu_custom_call.1} parent=5 // pred_check
        _
      $region10: #{tpu_custom_call.1} parent=5 // pred_check_branch
        %131 = sbr.rel (%p128) target = $region12
      $region11: #{tpu_custom_call.1} parent=5 // pred_region
        %s132 = ssub.s32 %s15, 1
        // Predicated region
        $region13: #{tpu_custom_call.1} parent=11 // pred_check
          %p133 = pneg %p62
        $region14: #{tpu_custom_call.1} parent=11 // pred_check_branch
          %135 = sbr.rel (%p133) target = $region16
        $region15: #{tpu_custom_call.1} parent=11 // pred_region
          %s136 = smul.u32 2, %s26
          %s137 = smul.u32 2, %s27
          %s139 = ssub.s32 256, 256
          %140 = vsyncadd [#allocation4], %s139
          %s141 = smul.addr %s136, 2
          %s142 = sadd.s32 %s137, %s141
          %s143 = smul.addr %s142, 64
          %s144 = scalar_lea.hbm %s0, %s143
          %s145 = sshll.u32 [#allocation3], 4
          %s146 = int_to_ptr.vmem [resolvable:$true] %s145
          %151 = dma.hbm_to_vmem [thread:$0]  %s144, 256, %s146, [#allocation4], 128, 128, 8
        $region16: #{tpu_custom_call.1} parent=11 // pred_fallthru
          _
      $region12: #{tpu_custom_call.1} parent=5 // pred_fallthru
        _
      %p152 = scmp.lt.s32.totalorder %s15, 2
      // Predicated region
      $region17: #{tpu_custom_call.1} parent=5 // pred_check
        %p153 = pneg %p152
      $region18: #{tpu_custom_call.1} parent=5 // pred_check_branch
        %155 = sbr.rel (%p153) target = $region20
      $region19: #{tpu_custom_call.1} parent=5 // pred_region
        // Predicated region
        $region21: #{tpu_custom_call.1} parent=19 // pred_check
          %p156 = pneg %p84
        $region22: #{tpu_custom_call.1} parent=19 // pred_check_branch
          %158 = sbr.rel (%p156) target = $region24
        $region23: #{tpu_custom_call.1} parent=19 // pred_region
          %s159 = sand.u32 %s74, 1
          %s160 = scalar_lea.sflag [#allocation7], %s159
          %s161 = sand.u32 %s74, 1
          %s162 = smul.addr %s161, 32
          %s163 = scalar_lea.vmem [#allocation6], %s162
          %s164 = smul.u32 4, %s24
          %s166 = ssub.s32 512, 512
          %167 = vsyncadd %s160, %s166
          %s168 = smul.addr %s164, 2
          %s169 = sadd.s32 %s22, %s168
          %s170 = smul.addr %s169, 128
          %s171 = scalar_lea.hbm %s1, %s170
          %s172 = sshll.u32 %s163, 4
          %s173 = int_to_ptr.vmem [resolvable:$true] %s172
          %178 = dma.hbm_to_vmem [thread:$0]  %s171, 512, %s173, %s160, 256, 128, 8
        $region24: #{tpu_custom_call.1} parent=19 // pred_fallthru
          _
      $region20: #{tpu_custom_call.1} parent=5 // pred_fallthru
        _
      %p179 = scmp.le.s32.totalorder 1, %s15
      %p180 = scmp.lt.s32.totalorder %s15, 3
      %p181 = pnand %p179, %p180
      %p182 = pneg %p181
      // Predicated region
      $region25: #{tpu_custom_call.1} parent=5 // pred_check
        _
      $region26: #{tpu_custom_call.1} parent=5 // pred_check_branch
        %184 = sbr.rel (%p181) target = $region28
      $region27: #{tpu_custom_call.1} parent=5 // pred_region
        %s185 = ssub.s32 %s15, 1
        // Predicated region
        $region29: #{tpu_custom_call.1} parent=27 // pred_check
          %p186 = pneg %p62
        $region30: #{tpu_custom_call.1} parent=27 // pred_check_branch
          %188 = sbr.rel (%p186) target = $region32
        $region31: #{tpu_custom_call.1} parent=27 // pred_region
          %189 = dma.done [#allocation4], 256
        $region32: #{tpu_custom_call.1} parent=27 // pred_fallthru
          _
        %s190 = sand.u32 %s77, 1
        %s191 = scalar_lea.sflag [#allocation7], %s190
        %s192 = sand.u32 %s77, 1
        %s193 = smul.addr %s192, 32
        %s194 = scalar_lea.vmem [#allocation6], %s193
        // Predicated region
        $region33: #{tpu_custom_call.1} parent=27 // pred_check
          %p195 = pneg %p90
        $region34: #{tpu_custom_call.1} parent=27 // pred_check_branch
          %197 = sbr.rel (%p195) target = $region36
        $region35: #{tpu_custom_call.1} parent=27 // pred_region
          %198 = dma.done %s191, 512
        $region36: #{tpu_custom_call.1} parent=27 // pred_fallthru
          _
        %p199 = pneg %p62
        %p200 = pneg %p59
        %s201 = sand.u32 %s77, 1
        %s202 = scalar_lea.sflag [#allocation7], %s201
        %s203 = sand.u32 %s77, 1
        %s204 = smul.addr %s203, 32
        %s205 = scalar_lea.vmem [#allocation6], %s204
        %p206 = pneg %p90
        %p207 = pneg %p87
        %p208 = pneg %p118
        %p209 = pneg %p115
        %s210 = sand.u32 %s105, 1
        %s211 = scalar_lea.sflag [#allocation5], %s210
        %s212 = sand.u32 %s105, 1
        %s213 = smul.addr %s212, 8
        %s214 = scalar_lea.vmem [#allocation8], %s213
        %s215 = smul.u32 2, %s26
        %s216 = smul.u32 2, %s27
        %s217 = smul.u32 4, %s27
        %s218 = smul.u32 2, %s26
        %p220 = scmp.eq.s32.totalorder %s27, 0
        // Predicated region
        $region37: #{tpu_custom_call.1} parent=27 // pred_check
          %p221 = pneg %p220
        $region38: #{tpu_custom_call.1} parent=27 // pred_check_branch
          %223 = sbr.rel (%p221) target = $region40
        $region39: #{tpu_custom_call.1} parent=27 // pred_region
          %224 = vst [vmem:[#allocation2] sm:$0xff] 0.0
          %225 = vst [vmem:[#allocation2 + $0x8] sm:$0xff] 0.0
        $region40: #{tpu_custom_call.1} parent=27 // pred_fallthru
          _
        %v226 = vld [vmem:[%s194] sm:$0xff]
        %v227 = vld [vmem:[%s194 + $0x8] sm:$0xff]
        %v228 = vld [vmem:[%s194 + $0x10] sm:$0xff]
        %v229 = vld [vmem:[%s194 + $0x18] sm:$0xff]
        %v230 = vshll.u32 %v226, 28
        %v231 = vshll.u32 %v227, 28
        %v232 = vshll.u32 %v228, 28
        %v233 = vshll.u32 %v229, 28
        %v234 = vshra.s32 %v230, 28
        %v235 = vshra.s32 %v231, 28
        %v236 = vshra.s32 %v232, 28
        %v237 = vshra.s32 %v233, 28
        %v238 = vcvt.s32.f32 %v234
        %v239 = vcvt.s32.f32 %v235
        %v240 = vcvt.s32.f32 %v236
        %v241 = vcvt.s32.f32 %v237
        %v242 = vpack.c.bf16 %v239, %v238
        %v243 = vpack.c.bf16 %v241, %v240
        %v244 = vshll.u32 %v226, 24
        %v245 = vshll.u32 %v227, 24
        %v246 = vshll.u32 %v228, 24
        %v247 = vshll.u32 %v229, 24
        %v248 = vshra.s32 %v244, 28
        %v249 = vshra.s32 %v245, 28
        %v250 = vshra.s32 %v246, 28
        %v251 = vshra.s32 %v247, 28
        %v252 = vcvt.s32.f32 %v248
        %v253 = vcvt.s32.f32 %v249
        %v254 = vcvt.s32.f32 %v250
        %v255 = vcvt.s32.f32 %v251
        %v256 = vpack.c.bf16 %v253, %v252
        %v257 = vpack.c.bf16 %v255, %v254
        %v258 = vshll.u32 %v226, 20
        %v259 = vshll.u32 %v227, 20
        %v260 = vshll.u32 %v228, 20
        %v261 = vshll.u32 %v229, 20
        %v262 = vshra.s32 %v258, 28
        %v263 = vshra.s32 %v259, 28
        %v264 = vshra.s32 %v260, 28
        %v265 = vshra.s32 %v261, 28
        %v266 = vcvt.s32.f32 %v262
        %v267 = vcvt.s32.f32 %v263
        %v268 = vcvt.s32.f32 %v264
        %v269 = vcvt.s32.f32 %v265
        %v270 = vpack.c.bf16 %v267, %v266
        %v271 = vpack.c.bf16 %v269, %v268
        %v272 = vshll.u32 %v226, 16
        %v273 = vshll.u32 %v227, 16
        %v274 = vshll.u32 %v228, 16
        %v275 = vshll.u32 %v229, 16
        %v276 = vshra.s32 %v272, 28
        %v277 = vshra.s32 %v273, 28
        %v278 = vshra.s32 %v274, 28
        %v279 = vshra.s32 %v275, 28
        %v280 = vcvt.s32.f32 %v276
        %v281 = vcvt.s32.f32 %v277
        %v282 = vcvt.s32.f32 %v278
        %v283 = vcvt.s32.f32 %v279
        %v284 = vpack.c.bf16 %v281, %v280
        %v285 = vpack.c.bf16 %v283, %v282
        %v286 = vshll.u32 %v226, 12
        %v287 = vshll.u32 %v227, 12
        %v288 = vshll.u32 %v228, 12
        %v289 = vshll.u32 %v229, 12
        %v290 = vshra.s32 %v286, 28
        %v291 = vshra.s32 %v287, 28
        %v292 = vshra.s32 %v288, 28
        %v293 = vshra.s32 %v289, 28
        %v294 = vcvt.s32.f32 %v290
        %v295 = vcvt.s32.f32 %v291
        %v296 = vcvt.s32.f32 %v292
        %v297 = vcvt.s32.f32 %v293
        %v298 = vpack.c.bf16 %v295, %v294
        %v299 = vpack.c.bf16 %v297, %v296
        %v300 = vshll.u32 %v226, 8
        %v301 = vshll.u32 %v227, 8
        %v302 = vshll.u32 %v228, 8
        %v303 = vshll.u32 %v229, 8
        %v304 = vshra.s32 %v300, 28
        %v305 = vshra.s32 %v301, 28
        %v306 = vshra.s32 %v302, 28
        %v307 = vshra.s32 %v303, 28
        %v308 = vcvt.s32.f32 %v304
        %v309 = vcvt.s32.f32 %v305
        %v310 = vcvt.s32.f32 %v306
        %v311 = vcvt.s32.f32 %v307
        %v312 = vpack.c.bf16 %v309, %v308
        %v313 = vpack.c.bf16 %v311, %v310
        %v314 = vshll.u32 %v226, 4
        %v315 = vshll.u32 %v227, 4
        %v316 = vshll.u32 %v228, 4
        %v317 = vshll.u32 %v229, 4
        %v318 = vshra.s32 %v314, 28
        %v319 = vshra.s32 %v315, 28
        %v320 = vshra.s32 %v316, 28
        %v321 = vshra.s32 %v317, 28
        %v322 = vcvt.s32.f32 %v318
        %v323 = vcvt.s32.f32 %v319
        %v324 = vcvt.s32.f32 %v320
        %v325 = vcvt.s32.f32 %v321
        %v326 = vpack.c.bf16 %v323, %v322
        %v327 = vpack.c.bf16 %v325, %v324
        %v328 = vshra.s32 %v226, 28
        %v329 = vshra.s32 %v227, 28
        %v330 = vshra.s32 %v228, 28
        %v331 = vshra.s32 %v229, 28
        %v332 = vcvt.s32.f32 %v328
        %v333 = vcvt.s32.f32 %v329
        %v334 = vcvt.s32.f32 %v330
        %v335 = vcvt.s32.f32 %v331
        %v336 = vpack.c.bf16 %v333, %v332
        %v337 = vpack.c.bf16 %v335, %v334
        %v338 = vld [vmem:[#allocation2] sm:$0xff]
        %v339 = vld [vmem:[#allocation2 + $0x8] sm:$0xff]
        %v340 = vld [vmem:[#allocation3] sm:$0xff]
        %v341 = vld [vmem:[#allocation3 + $0x8] sm:$0xff]
        %v344 = vunpack.c.l.b16 %v340
        %v345 = vunpack.c.h.b16 %v340
        %v346 = vunpack.c.l.b16 %v341
        %v347 = vunpack.c.h.b16 %v341
        %v348 = vpack.c.b16 %v346, %v344
        %v349 = vpack.c.b16 %v347, %v345
        %352 = vmatprep.subr.bf16.mxu0 0
        %353 = vmatpush1.bf16.msra.mxu0 %v285
        %354 = vmatprep.subr.bf16.mxu0 0
        %355 = vmatpush1.bf16.msra.mxu0 %v284
        %356 = vmatprep.subr.bf16.mxu0 0
        %357 = vmatpush1.bf16.msra.mxu0 %v271
        %358 = vmatprep.subr.bf16.mxu0 0
        %359 = vmatpush1.bf16.msra.mxu0 %v270
        %360 = vmatprep.subr.bf16.mxu0 0
        %361 = vmatpush1.bf16.msra.mxu0 %v257
        %362 = vmatprep.subr.bf16.mxu0 0
        %363 = vmatpush1.bf16.msra.mxu0 %v256
        %364 = vmatprep.subr.bf16.mxu0 0
        %365 = vmatpush1.bf16.msra.mxu0 %v243
        %366 = vmatprep.subr.bf16.mxu0 0
        %367 = vmatpush1.bf16.msra.mxu0 %v242
        %368 = vmatprep.subr.bf16.mxu0 0
        %369 = vmatpush2.bf16.msra.mxu0 %v337
        %370 = vmatprep.subr.bf16.mxu0 0
        %371 = vmatpush2.bf16.msra.mxu0 %v336
        %372 = vmatprep.subr.bf16.mxu0 0
        %373 = vmatpush2.bf16.msra.mxu0 %v327
        %374 = vmatprep.subr.bf16.mxu0 0
        %375 = vmatpush2.bf16.msra.mxu0 %v326
        %376 = vmatprep.subr.bf16.mxu0 0
        %377 = vmatpush2.bf16.msra.mxu0 %v313
        %378 = vmatprep.subr.bf16.mxu0 0
        %379 = vmatpush2.bf16.msra.mxu0 %v312
        %380 = vmatprep.subr.bf16.mxu0 0
        %381 = vmatpush2.bf16.msra.mxu0 %v299
        %382 = vmatprep.subr.bf16.mxu0 0
        %383 = vmatpush2.bf16.msra.mxu0 %v298
        %384 = vmatprep.mubr.bf16.mxu0 %v349
        %385 = vmatmul.mubr.bf16.gmra.mxu0 %v348
        %v386 = vpop.f32.mrf.mxu0
        %v387 = vadd.f32 0.0, %v386
        %v388 = vpop.f32.mrf.mxu0
        %v389 = vpop.f32.mrf.mxu0
        %v390 = vadd.f32 0.0, %v389
        %v391 = vpop.f32.mrf.mxu0
        %392 = vdwg.mxu0
        %v393 = vadd.f32 %v338, %v387
        %v394 = vadd.f32 %v339, %v390
        %395 = vst [vmem:[#allocation2] sm:$0xff] %v393
        %396 = vst [vmem:[#allocation2 + $0x8] sm:$0xff] %v394
        // Predicated region
        $region41: #{tpu_custom_call.1} parent=27 // pred_check
          %p397 = pneg %p220
        $region42: #{tpu_custom_call.1} parent=27 // pred_check_branch
          %399 = sbr.rel (%p397) target = $region44
        $region43: #{tpu_custom_call.1} parent=27 // pred_region
          %v400 = vld [vmem:[#allocation2] sm:$0xff]
          %v401 = vld [vmem:[#allocation2 + $0x8] sm:$0xff]
          %v402 = vpack.c.bf16 %v401, %v400
          %v404 = vunpack.c.l.b16 %v402
          %v405 = vunpack.c.h.b16 %v402
          %v406 = vpack.c.b16 %v404, %v404
          %v407 = vpack.c.b16 %v405, %v405
          %410 = vst [vmem:[%s214] sm:$0xf] %v406
          %411 = vst [vmem:[%s214 + $0x4] sm:$0xf] %v407
        $region44: #{tpu_custom_call.1} parent=27 // pred_fallthru
          _
        %s412 = sand.u32 %s105, 1
        %s413 = scalar_lea.sflag [#allocation5], %s412
        %s414 = sand.u32 %s105, 1
        %s415 = smul.addr %s414, 8
        %s416 = scalar_lea.vmem [#allocation8], %s415
        // Predicated region
        $region45: #{tpu_custom_call.1} parent=27 // pred_check
          %p417 = pneg %p115
        $region46: #{tpu_custom_call.1} parent=27 // pred_check_branch
          %419 = sbr.rel (%p417) target = $region48
        $region47: #{tpu_custom_call.1} parent=27 // pred_region
          %s420 = smul.u32 2, %s26
          %s422 = ssub.s32 128, 128
          %423 = vsyncadd %s413, %s422
          %s424 = smul.addr %s420, 2
          %s425 = sadd.s32 %s25, %s424
          %s426 = smul.addr %s425, 64
          %s427 = scalar_lea.hbm %s2, %s426
          %s428 = sshll.u32 %s416, 4
          %s429 = int_to_ptr.vmem [resolvable:$true] %s428
          %434 = dma.vmem_to_hbm [thread:$0]  %s429, 128, %s427, %s413, 64, 128, 4
        $region48: #{tpu_custom_call.1} parent=27 // pred_fallthru
          _
      $region28: #{tpu_custom_call.1} parent=5 // pred_fallthru
        _
      %p435 = scmp.le.s32.totalorder 2, %s15
      // Predicated region
      $region49: #{tpu_custom_call.1} parent=5 // pred_check
        %p436 = pneg %p435
      $region50: #{tpu_custom_call.1} parent=5 // pred_check_branch
        %438 = sbr.rel (%p436) target = $region52
      $region51: #{tpu_custom_call.1} parent=5 // pred_region
        %s439 = ssub.s32 %s15, 2
        // Predicated region
        $region53: #{tpu_custom_call.1} parent=51 // pred_check
          %p440 = pneg %p121
        $region54: #{tpu_custom_call.1} parent=51 // pred_check_branch
          %442 = sbr.rel (%p440) target = $region56
        $region55: #{tpu_custom_call.1} parent=51 // pred_region
          %s443 = sand.u32 %s106, 1
          %s444 = scalar_lea.sflag [#allocation5], %s443
          %s445 = sand.u32 %s106, 1
          %s446 = smul.addr %s445, 8
          %s447 = scalar_lea.vmem [#allocation8], %s446
          %448 = dma.done %s444, 128
        $region56: #{tpu_custom_call.1} parent=51 // pred_fallthru
          _
      $region52: #{tpu_custom_call.1} parent=5 // pred_fallthru
        _
    $region6: #{tpu_custom_call.1} parent=1 // loop_footer
      %s19 = sadd.s32 1, %s15
    $region7: #{tpu_custom_call.1} parent=1 // loop_footer_branch
      %14 = sbr.rel target = $region3
    $region8: #{tpu_custom_call.1} parent=1 // loop_exit
      _
    %449 = vsyncpa [#allocation4], 1
    %s450 = scalar_lea.sflag [#allocation4], 1
    %451 = vsyncpa %s450, 1
    %452 = vsyncpa [#allocation7], 1
    %s453 = scalar_lea.sflag [#allocation7], 1
    %454 = vsyncpa %s453, 1
    %455 = vsyncpa [#allocation5], 1
    %s456 = scalar_lea.sflag [#allocation5], 1
    %457 = vsyncpa %s456, 1

</llo_original>
